<compile_context>
chip_gen: v6e
topology: v6e:2x2x1
jax: 0.10.0
libtpu: 0.0.40
codegen_flags: <defaults>
</compile_context>

<pallas_src>
import functools

import jax
import jax.numpy as jnp
from jax.experimental import pallas as pl
from jax.experimental.pallas import tpu as pltpu


def _siamese_lstm_kernel(x_ref, w_ih_ref, w_hh_ref, b_ref, w_fc_ref, b_fc_ref,
                         dist_ref, *, B, T, H, N):
    """Fused forward: one padded batched LSTM over both towers + fc/relu + L2.

    N is the padded fused batch (2B rounded up to a multiple of 8).  The
    g-gate columns of w_ih/w_hh/b arrive pre-scaled by 2 so that a single
    full-width sigmoid plus a hoisted per-lane (scale, shift) recovers
    sigmoid for the i/f/o gates and tanh for the g gate in ONE EUP pass.
    """
    w_ih = w_ih_ref[...]                             # (D, 4H)  bf16
    w_hh = w_hh_ref[...]                             # (H, 4H)  bf16
    b = b_ref[...]                                   # (1, 4H)  f32 (b_ih + b_hh)
    w_fc = w_fc_ref[...]                             # (H, E)   bf16
    b_fc = b_fc_ref[...]                             # (1, E)   f32

    x = x_ref[...]                                   # (T*N, D) bf16, time-major

    # Hoisted input projection for all timesteps & both towers; bias folded in.
    gates_x = jnp.dot(x, w_ih,
                      preferred_element_type=jnp.float32) + b   # (T*N, 4H) f32

    # Hoisted per-lane (scale, shift): lanes [2H, 3H) hold the cell-candidate
    # gate g whose pre-activation was doubled in the wrapper, so
    #   act = sigmoid(gates) * scale + shift
    # yields sigmoid on i/f/o lanes and tanh on g lanes with one EUP pass.
    lane = jax.lax.broadcasted_iota(jnp.int32, (N, 4 * H), 1)
    is_g = (lane >= 2 * H) & (lane < 3 * H)
    g_scale = jnp.where(is_g, 2.0, 1.0).astype(jnp.float32)
    g_shift = jnp.where(is_g, -1.0, 0.0).astype(jnp.float32)

    h = jnp.zeros((N, H), jnp.float32)
    c = jnp.zeros((N, H), jnp.float32)

    # T is small & static -> unroll; only h @ W_hh is on the dependent chain.
    # TODO(synk): if a bundle dump shows Mosaic re-pushing W_hh each step,
    # switch to pltpu.matmul_push_rhs / matmul_acc_lhs to keep it resident.
    for t in range(T):
        gates = gates_x[t * N:(t + 1) * N, :] + jnp.dot(
            h.astype(jnp.bfloat16), w_hh, preferred_element_type=jnp.float32)
        act = jax.nn.sigmoid(gates) * g_scale + g_shift          # (N, 4H) f32
        i_g = act[:, 0 * H:1 * H]
        f_g = act[:, 1 * H:2 * H]
        g_g = act[:, 2 * H:3 * H]
        o_g = act[:, 3 * H:4 * H]
        c = f_g * c + i_g * g_g
        h = o_g * jnp.tanh(c)

    # out[:, -1, :] is the final hidden state `h`; one fc matmul for both towers.
    emb = jnp.maximum(
        jnp.dot(h.astype(jnp.bfloat16), w_fc,
                preferred_element_type=jnp.float32) + b_fc, 0.0)  # (N, E)

    diff = emb[:B, :] - emb[B:2 * B, :]
    # torch.norm(emb1 - emb2, p=2, dim=1) -> (B,)
    dist = jnp.sqrt(jnp.sum(diff * diff, axis=1))                 # (B,)
    dist_ref[...] = dist[None, :]                                 # (1, B)


def siamese_lstm_forward(x1, x2, w_ih, w_hh, b, w_fc, b_fc):
    B, T, D = x1.shape
    H = w_hh.shape[0]

    # Pad the fused batch 2B up to a multiple of 8 so every per-step slab and
    # the recurrent state are exact (8, 128) f32 vreg tiles inside the loop.
    N = ((2 * B + 7) // 8) * 8
    x = jnp.concatenate([x1, x2], axis=0)                       # (2B, T, D)
    if N > 2 * B:
        x = jnp.concatenate(
            [x, jnp.zeros((N - 2 * B, T, D), x.dtype)], axis=0)  # (N, T, D)
    # Flatten time-major so each step's gate slab gates_x[t*N:(t+1)*N] is a
    # contiguous, tile-aligned sublane slice.
    x = jnp.transpose(x, (1, 0, 2)).reshape(T * N, D)            # (T*N, D)
    # TODO(synk): at scale, produce x time-major upstream (or fuse the
    # transpose into the pallas_call input) to avoid this extra HBM round trip.

    # Fold the 2x scale for the g gate (tanh via 2*sigmoid(2z)-1) into the
    # g columns of the pre-activation weights/bias; exact (power-of-two scale).
    col = jnp.arange(4 * H)
    col_scale = jnp.where((col >= 2 * H) & (col < 3 * H), 2.0, 1.0)
    w_ih_s = (w_ih * col_scale[None, :])
    w_hh_s = (w_hh * col_scale[None, :])
    b_s = (b * col_scale[None, :]).astype(jnp.float32)

    # Pre-cast MXU operands to bf16 in the wrapper (halves DMA bytes, removes
    # in-kernel pack); biases and elementwise math stay f32.
    x_b = x.astype(jnp.bfloat16)
    w_ih_b = w_ih_s.astype(jnp.bfloat16)
    w_hh_b = w_hh_s.astype(jnp.bfloat16)
    w_fc_b = w_fc.astype(jnp.bfloat16)
    b_fc_f = b_fc.astype(jnp.float32)

    kernel = functools.partial(_siamese_lstm_kernel, B=B, T=T, H=H, N=N)
    vmem = lambda: pl.BlockSpec(memory_space=pltpu.MemorySpace.VMEM)

    out = pl.pallas_call(
        kernel,
        out_shape=jax.ShapeDtypeStruct((1, B), jnp.float32),
        in_specs=[vmem() for _ in range(6)],
        out_specs=vmem(),
        # No grid: total footprint is <100 KB, far below VMEM on all chips.
        # Before scaling B: add grid=(pl.cdiv(N, TB),) with a batch BlockSpec
        # and dimension_semantics=("parallel",) (2 TCs + 64 MiB VMEM on v7x),
        # and pad the output lane dim to a multiple of 128.
    )(x_b, w_ih_b, w_hh_b, b_s, w_fc_b, b_fc_f)
    return out[0]  # (B,)


def _reference_forward(x1, x2, w_ih, w_hh, b, w_fc, b_fc):
    """Pure-JAX reference mirroring the PyTorch module (same bf16 MXU inputs)."""
    H = w_hh.shape[0]
    w_ih_b = w_ih.astype(jnp.bfloat16)
    w_hh_b = w_hh.astype(jnp.bfloat16)
    w_fc_b = w_fc.astype(jnp.bfloat16)

    def once(x):
        Bb, T, _ = x.shape
        h = jnp.zeros((Bb, H), jnp.float32)
        c = jnp.zeros((Bb, H), jnp.float32)
        for t in range(T):
            gx = jnp.dot(x[:, t, :].astype(jnp.bfloat16), w_ih_b,
                         preferred_element_type=jnp.float32) + b
            gates = gx + jnp.dot(h.astype(jnp.bfloat16), w_hh_b,
                                 preferred_element_type=jnp.float32)
            i_g = jax.nn.sigmoid(gates[:, 0 * H:1 * H])
            f_g = jax.nn.sigmoid(gates[:, 1 * H:2 * H])
            g_g = jnp.tanh(gates[:, 2 * H:3 * H])
            o_g = jax.nn.sigmoid(gates[:, 3 * H:4 * H])
            c = f_g * c + i_g * g_g
            h = o_g * jnp.tanh(c)
        emb = jnp.dot(h.astype(jnp.bfloat16), w_fc_b,
                      preferred_element_type=jnp.float32) + b_fc
        return jnp.maximum(emb, 0.0)

    d = once(x1) - once(x2)
    return jnp.sqrt(jnp.sum(d * d, axis=1))


if __name__ == "__main__":
    # Small shapes consistent with the module: batch=2, seq=8,
    # input_dim=16, lstm_units=32, embedding_dim=32.
    B, T, D, H, E = 2, 8, 16, 32, 32

    key = jax.random.PRNGKey(0)
    ks = jax.random.split(key, 8)
    scale = 0.1
    x1 = jax.random.normal(ks[0], (B, T, D), jnp.float32)
    x2 = jax.random.normal(ks[1], (B, T, D), jnp.float32)
    w_ih = scale * jax.random.normal(ks[2], (D, 4 * H), jnp.float32)
    w_hh = scale * jax.random.normal(ks[3], (H, 4 * H), jnp.float32)
    # b = b_ih + b_hh combined, kept 2D (1, 4H) for clean VMEM layout.
    b = scale * jax.random.normal(ks[4], (1, 4 * H), jnp.float32)
    w_fc = scale * jax.random.normal(ks[5], (H, E), jnp.float32)
    b_fc = scale * jax.random.normal(ks[6], (1, E), jnp.float32)

    dist = siamese_lstm_forward(x1, x2, w_ih, w_hh, b, w_fc, b_fc)
    jax.block_until_ready(dist)

    ref = _reference_forward(x1, x2, w_ih, w_hh, b, w_fc, b_fc)
    assert dist.shape == (B,)
    # bf16 MXU inputs (f32 accumulate) in both kernel and reference; modest tol.
    assert jnp.allclose(dist, ref, atol=1e-2, rtol=1e-2), (dist, ref)

    print("KERNEL_OK")
</pallas_src>

<mosaic_0001>
module attributes {stable_mosaic.version = 11 : i64} {
  func.func @_siamese_lstm_kernel(%arg0: memref<64x16xbf16, #tpu.memory_space<vmem>>, %arg1: memref<16x128xbf16, #tpu.memory_space<vmem>>, %arg2: memref<32x128xbf16, #tpu.memory_space<vmem>>, %arg3: memref<1x128xf32, #tpu.memory_space<vmem>>, %arg4: memref<32x32xbf16, #tpu.memory_space<vmem>>, %arg5: memref<1x32xf32, #tpu.memory_space<vmem>>, %arg6: memref<1x2xf32, #tpu.memory_space<vmem>>) attributes {dimension_semantics = [], scalar_prefetch = 0 : i64, scratch_operands = 0 : i64, tpu.core_type = #tpu.core_type<tc>} {
    %c0 = arith.constant 0 : index
    %c0_0 = arith.constant 0 : index
    %0 = vector.load %arg1[%c0, %c0_0] : memref<16x128xbf16, #tpu.memory_space<vmem>>, vector<16x128xbf16>
    %c0_1 = arith.constant 0 : index
    %c0_2 = arith.constant 0 : index
    %1 = vector.load %arg2[%c0_1, %c0_2] : memref<32x128xbf16, #tpu.memory_space<vmem>>, vector<32x128xbf16>
    %c0_3 = arith.constant 0 : index
    %c0_4 = arith.constant 0 : index
    %2 = vector.load %arg3[%c0_3, %c0_4] : memref<1x128xf32, #tpu.memory_space<vmem>>, vector<1x128xf32>
    %c0_5 = arith.constant 0 : index
    %c0_6 = arith.constant 0 : index
    %3 = vector.load %arg4[%c0_5, %c0_6] : memref<32x32xbf16, #tpu.memory_space<vmem>>, vector<32x32xbf16>
    %c0_7 = arith.constant 0 : index
    %c0_8 = arith.constant 0 : index
    %4 = vector.load %arg5[%c0_7, %c0_8] : memref<1x32xf32, #tpu.memory_space<vmem>>, vector<1x32xf32>
    %c0_9 = arith.constant 0 : index
    %c0_10 = arith.constant 0 : index
    %5 = vector.load %arg0[%c0_9, %c0_10] : memref<64x16xbf16, #tpu.memory_space<vmem>>, vector<64x16xbf16>
    %cst = arith.constant dense<0.000000e+00> : vector<64x128xf32>
    %6 = tpu.matmul %5, %0, %cst {dimension_numbers = #tpu.dot_dimension_numbers<[1], [0], [0], [1], [0, 0, 1, 1], [], []>} : vector<64x16xbf16>, vector<16x128xbf16>, vector<64x128xf32> -> vector<64x128xf32>
    %7 = vector.broadcast %2 : vector<1x128xf32> to vector<64x128xf32>
    %8 = arith.addf %6, %7 : vector<64x128xf32>
    %9 = tpu.iota {dimensions = array<i32: 1>} : vector<8x128xi32>
    %c64_i32 = arith.constant 64 : i32
    %10 = vector.broadcast %c64_i32 : i32 to vector<8x128xi32>
    %11 = arith.cmpi sge, %9, %10 : vector<8x128xi32>
    %c96_i32 = arith.constant 96 : i32
    %12 = vector.broadcast %c96_i32 : i32 to vector<8x128xi32>
    %13 = arith.cmpi slt, %9, %12 : vector<8x128xi32>
    %14 = arith.andi %11, %13 : vector<8x128xi1>
    %cst_11 = arith.constant 2.000000e+00 : f32
    %cst_12 = arith.constant 1.000000e+00 : f32
    %15 = vector.broadcast %cst_11 : f32 to vector<8x128xf32>
    %16 = vector.broadcast %cst_12 : f32 to vector<8x128xf32>
    %17 = arith.select %14, %15, %16 : vector<8x128xi1>, vector<8x128xf32>
    %cst_13 = arith.constant -1.000000e+00 : f32
    %cst_14 = arith.constant 0.000000e+00 : f32
    %18 = vector.broadcast %cst_13 : f32 to vector<8x128xf32>
    %19 = vector.broadcast %cst_14 : f32 to vector<8x128xf32>
    %20 = arith.select %14, %18, %19 : vector<8x128xi1>, vector<8x128xf32>
    %cst_15 = arith.constant 0.000000e+00 : f32
    %21 = vector.broadcast %cst_15 : f32 to vector<8x32xf32>
    %cst_16 = arith.constant 0.000000e+00 : f32
    %22 = vector.broadcast %cst_16 : f32 to vector<8x32xf32>
    %23 = vector.extract_strided_slice %8 {offsets = [0, 0], sizes = [8, 128], strides = [1, 1]} : vector<64x128xf32> to vector<8x128xf32>
    %24 = arith.truncf %21 : vector<8x32xf32> to vector<8x32xbf16>
    %cst_17 = arith.constant dense<0.000000e+00> : vector<8x128xf32>
    %25 = tpu.matmul %24, %1, %cst_17 {dimension_numbers = #tpu.dot_dimension_numbers<[1], [0], [0], [1], [0, 0, 1, 1], [], []>} : vector<8x32xbf16>, vector<32x128xbf16>, vector<8x128xf32> -> vector<8x128xf32>
    %26 = arith.addf %23, %25 : vector<8x128xf32>
    %27 = arith.negf %26 : vector<8x128xf32>
    %28 = math.exp %27 : vector<8x128xf32>
    %cst_18 = arith.constant 1.000000e+00 : f32
    %29 = vector.broadcast %cst_18 : f32 to vector<8x128xf32>
    %30 = arith.addf %29, %28 : vector<8x128xf32>
    %31 = arith.divf %29, %30 : vector<8x128xf32>
    %32 = arith.mulf %31, %17 : vector<8x128xf32>
    %33 = arith.addf %32, %20 : vector<8x128xf32>
    %34 = vector.extract_strided_slice %33 {offsets = [0, 0], sizes = [8, 32], strides = [1, 1]} : vector<8x128xf32> to vector<8x32xf32>
    %35 = vector.extract_strided_slice %33 {offsets = [0, 32], sizes = [8, 32], strides = [1, 1]} : vector<8x128xf32> to vector<8x32xf32>
    %36 = vector.extract_strided_slice %33 {offsets = [0, 64], sizes = [8, 32], strides = [1, 1]} : vector<8x128xf32> to vector<8x32xf32>
    %37 = vector.extract_strided_slice %33 {offsets = [0, 96], sizes = [8, 32], strides = [1, 1]} : vector<8x128xf32> to vector<8x32xf32>
    %38 = arith.mulf %35, %22 : vector<8x32xf32>
    %39 = arith.mulf %34, %36 : vector<8x32xf32>
    %40 = arith.addf %38, %39 : vector<8x32xf32>
    %41 = math.tanh %40 : vector<8x32xf32>
    %42 = arith.mulf %37, %41 : vector<8x32xf32>
    %43 = vector.extract_strided_slice %8 {offsets = [8, 0], sizes = [8, 128], strides = [1, 1]} : vector<64x128xf32> to vector<8x128xf32>
    %44 = arith.truncf %42 : vector<8x32xf32> to vector<8x32xbf16>
    %cst_19 = arith.constant dense<0.000000e+00> : vector<8x128xf32>
    %45 = tpu.matmul %44, %1, %cst_19 {dimension_numbers = #tpu.dot_dimension_numbers<[1], [0], [0], [1], [0, 0, 1, 1], [], []>} : vector<8x32xbf16>, vector<32x128xbf16>, vector<8x128xf32> -> vector<8x128xf32>
    %46 = arith.addf %43, %45 : vector<8x128xf32>
    %47 = arith.negf %46 : vector<8x128xf32>
    %48 = math.exp %47 : vector<8x128xf32>
    %cst_20 = arith.constant 1.000000e+00 : f32
    %49 = vector.broadcast %cst_20 : f32 to vector<8x128xf32>
    %50 = arith.addf %49, %48 : vector<8x128xf32>
    %51 = arith.divf %49, %50 : vector<8x128xf32>
    %52 = arith.mulf %51, %17 : vector<8x128xf32>
    %53 = arith.addf %52, %20 : vector<8x128xf32>
    %54 = vector.extract_strided_slice %53 {offsets = [0, 0], sizes = [8, 32], strides = [1, 1]} : vector<8x128xf32> to vector<8x32xf32>
    %55 = vector.extract_strided_slice %53 {offsets = [0, 32], sizes = [8, 32], strides = [1, 1]} : vector<8x128xf32> to vector<8x32xf32>
    %56 = vector.extract_strided_slice %53 {offsets = [0, 64], sizes = [8, 32], strides = [1, 1]} : vector<8x128xf32> to vector<8x32xf32>
    %57 = vector.extract_strided_slice %53 {offsets = [0, 96], sizes = [8, 32], strides = [1, 1]} : vector<8x128xf32> to vector<8x32xf32>
    %58 = arith.mulf %55, %40 : vector<8x32xf32>
    %59 = arith.mulf %54, %56 : vector<8x32xf32>
    %60 = arith.addf %58, %59 : vector<8x32xf32>
    %61 = math.tanh %60 : vector<8x32xf32>
    %62 = arith.mulf %57, %61 : vector<8x32xf32>
    %63 = vector.extract_strided_slice %8 {offsets = [16, 0], sizes = [8, 128], strides = [1, 1]} : vector<64x128xf32> to vector<8x128xf32>
    %64 = arith.truncf %62 : vector<8x32xf32> to vector<8x32xbf16>
    %cst_21 = arith.constant dense<0.000000e+00> : vector<8x128xf32>
    %65 = tpu.matmul %64, %1, %cst_21 {dimension_numbers = #tpu.dot_dimension_numbers<[1], [0], [0], [1], [0, 0, 1, 1], [], []>} : vector<8x32xbf16>, vector<32x128xbf16>, vector<8x128xf32> -> vector<8x128xf32>
    %66 = arith.addf %63, %65 : vector<8x128xf32>
    %67 = arith.negf %66 : vector<8x128xf32>
    %68 = math.exp %67 : vector<8x128xf32>
    %cst_22 = arith.constant 1.000000e+00 : f32
    %69 = vector.broadcast %cst_22 : f32 to vector<8x128xf32>
    %70 = arith.addf %69, %68 : vector<8x128xf32>
    %71 = arith.divf %69, %70 : vector<8x128xf32>
    %72 = arith.mulf %71, %17 : vector<8x128xf32>
    %73 = arith.addf %72, %20 : vector<8x128xf32>
    %74 = vector.extract_strided_slice %73 {offsets = [0, 0], sizes = [8, 32], strides = [1, 1]} : vector<8x128xf32> to vector<8x32xf32>
    %75 = vector.extract_strided_slice %73 {offsets = [0, 32], sizes = [8, 32], strides = [1, 1]} : vector<8x128xf32> to vector<8x32xf32>
    %76 = vector.extract_strided_slice %73 {offsets = [0, 64], sizes = [8, 32], strides = [1, 1]} : vector<8x128xf32> to vector<8x32xf32>
    %77 = vector.extract_strided_slice %73 {offsets = [0, 96], sizes = [8, 32], strides = [1, 1]} : vector<8x128xf32> to vector<8x32xf32>
    %78 = arith.mulf %75, %60 : vector<8x32xf32>
    %79 = arith.mulf %74, %76 : vector<8x32xf32>
    %80 = arith.addf %78, %79 : vector<8x32xf32>
    %81 = math.tanh %80 : vector<8x32xf32>
    %82 = arith.mulf %77, %81 : vector<8x32xf32>
    %83 = vector.extract_strided_slice %8 {offsets = [24, 0], sizes = [8, 128], strides = [1, 1]} : vector<64x128xf32> to vector<8x128xf32>
    %84 = arith.truncf %82 : vector<8x32xf32> to vector<8x32xbf16>
    %cst_23 = arith.constant dense<0.000000e+00> : vector<8x128xf32>
    %85 = tpu.matmul %84, %1, %cst_23 {dimension_numbers = #tpu.dot_dimension_numbers<[1], [0], [0], [1], [0, 0, 1, 1], [], []>} : vector<8x32xbf16>, vector<32x128xbf16>, vector<8x128xf32> -> vector<8x128xf32>
    %86 = arith.addf %83, %85 : vector<8x128xf32>
    %87 = arith.negf %86 : vector<8x128xf32>
    %88 = math.exp %87 : vector<8x128xf32>
    %cst_24 = arith.constant 1.000000e+00 : f32
    %89 = vector.broadcast %cst_24 : f32 to vector<8x128xf32>
    %90 = arith.addf %89, %88 : vector<8x128xf32>
    %91 = arith.divf %89, %90 : vector<8x128xf32>
    %92 = arith.mulf %91, %17 : vector<8x128xf32>
    %93 = arith.addf %92, %20 : vector<8x128xf32>
    %94 = vector.extract_strided_slice %93 {offsets = [0, 0], sizes = [8, 32], strides = [1, 1]} : vector<8x128xf32> to vector<8x32xf32>
    %95 = vector.extract_strided_slice %93 {offsets = [0, 32], sizes = [8, 32], strides = [1, 1]} : vector<8x128xf32> to vector<8x32xf32>
    %96 = vector.extract_strided_slice %93 {offsets = [0, 64], sizes = [8, 32], strides = [1, 1]} : vector<8x128xf32> to vector<8x32xf32>
    %97 = vector.extract_strided_slice %93 {offsets = [0, 96], sizes = [8, 32], strides = [1, 1]} : vector<8x128xf32> to vector<8x32xf32>
    %98 = arith.mulf %95, %80 : vector<8x32xf32>
    %99 = arith.mulf %94, %96 : vector<8x32xf32>
    %100 = arith.addf %98, %99 : vector<8x32xf32>
    %101 = math.tanh %100 : vector<8x32xf32>
    %102 = arith.mulf %97, %101 : vector<8x32xf32>
    %103 = vector.extract_strided_slice %8 {offsets = [32, 0], sizes = [8, 128], strides = [1, 1]} : vector<64x128xf32> to vector<8x128xf32>
    %104 = arith.truncf %102 : vector<8x32xf32> to vector<8x32xbf16>
    %cst_25 = arith.constant dense<0.000000e+00> : vector<8x128xf32>
    %105 = tpu.matmul %104, %1, %cst_25 {dimension_numbers = #tpu.dot_dimension_numbers<[1], [0], [0], [1], [0, 0, 1, 1], [], []>} : vector<8x32xbf16>, vector<32x128xbf16>, vector<8x128xf32> -> vector<8x128xf32>
    %106 = arith.addf %103, %105 : vector<8x128xf32>
    %107 = arith.negf %106 : vector<8x128xf32>
    %108 = math.exp %107 : vector<8x128xf32>
    %cst_26 = arith.constant 1.000000e+00 : f32
    %109 = vector.broadcast %cst_26 : f32 to vector<8x128xf32>
    %110 = arith.addf %109, %108 : vector<8x128xf32>
    %111 = arith.divf %109, %110 : vector<8x128xf32>
    %112 = arith.mulf %111, %17 : vector<8x128xf32>
    %113 = arith.addf %112, %20 : vector<8x128xf32>
    %114 = vector.extract_strided_slice %113 {offsets = [0, 0], sizes = [8, 32], strides = [1, 1]} : vector<8x128xf32> to vector<8x32xf32>
    %115 = vector.extract_strided_slice %113 {offsets = [0, 32], sizes = [8, 32], strides = [1, 1]} : vector<8x128xf32> to vector<8x32xf32>
    %116 = vector.extract_strided_slice %113 {offsets = [0, 64], sizes = [8, 32], strides = [1, 1]} : vector<8x128xf32> to vector<8x32xf32>
    %117 = vector.extract_strided_slice %113 {offsets = [0, 96], sizes = [8, 32], strides = [1, 1]} : vector<8x128xf32> to vector<8x32xf32>
    %118 = arith.mulf %115, %100 : vector<8x32xf32>
    %119 = arith.mulf %114, %116 : vector<8x32xf32>
    %120 = arith.addf %118, %119 : vector<8x32xf32>
    %121 = math.tanh %120 : vector<8x32xf32>
    %122 = arith.mulf %117, %121 : vector<8x32xf32>
    %123 = vector.extract_strided_slice %8 {offsets = [40, 0], sizes = [8, 128], strides = [1, 1]} : vector<64x128xf32> to vector<8x128xf32>
    %124 = arith.truncf %122 : vector<8x32xf32> to vector<8x32xbf16>
    %cst_27 = arith.constant dense<0.000000e+00> : vector<8x128xf32>
    %125 = tpu.matmul %124, %1, %cst_27 {dimension_numbers = #tpu.dot_dimension_numbers<[1], [0], [0], [1], [0, 0, 1, 1], [], []>} : vector<8x32xbf16>, vector<32x128xbf16>, vector<8x128xf32> -> vector<8x128xf32>
    %126 = arith.addf %123, %125 : vector<8x128xf32>
    %127 = arith.negf %126 : vector<8x128xf32>
    %128 = math.exp %127 : vector<8x128xf32>
    %cst_28 = arith.constant 1.000000e+00 : f32
    %129 = vector.broadcast %cst_28 : f32 to vector<8x128xf32>
    %130 = arith.addf %129, %128 : vector<8x128xf32>
    %131 = arith.divf %129, %130 : vector<8x128xf32>
    %132 = arith.mulf %131, %17 : vector<8x128xf32>
    %133 = arith.addf %132, %20 : vector<8x128xf32>
    %134 = vector.extract_strided_slice %133 {offsets = [0, 0], sizes = [8, 32], strides = [1, 1]} : vector<8x128xf32> to vector<8x32xf32>
    %135 = vector.extract_strided_slice %133 {offsets = [0, 32], sizes = [8, 32], strides = [1, 1]} : vector<8x128xf32> to vector<8x32xf32>
    %136 = vector.extract_strided_slice %133 {offsets = [0, 64], sizes = [8, 32], strides = [1, 1]} : vector<8x128xf32> to vector<8x32xf32>
    %137 = vector.extract_strided_slice %133 {offsets = [0, 96], sizes = [8, 32], strides = [1, 1]} : vector<8x128xf32> to vector<8x32xf32>
    %138 = arith.mulf %135, %120 : vector<8x32xf32>
    %139 = arith.mulf %134, %136 : vector<8x32xf32>
    %140 = arith.addf %138, %139 : vector<8x32xf32>
    %141 = math.tanh %140 : vector<8x32xf32>
    %142 = arith.mulf %137, %141 : vector<8x32xf32>
    %143 = vector.extract_strided_slice %8 {offsets = [48, 0], sizes = [8, 128], strides = [1, 1]} : vector<64x128xf32> to vector<8x128xf32>
    %144 = arith.truncf %142 : vector<8x32xf32> to vector<8x32xbf16>
    %cst_29 = arith.constant dense<0.000000e+00> : vector<8x128xf32>
    %145 = tpu.matmul %144, %1, %cst_29 {dimension_numbers = #tpu.dot_dimension_numbers<[1], [0], [0], [1], [0, 0, 1, 1], [], []>} : vector<8x32xbf16>, vector<32x128xbf16>, vector<8x128xf32> -> vector<8x128xf32>
    %146 = arith.addf %143, %145 : vector<8x128xf32>
    %147 = arith.negf %146 : vector<8x128xf32>
    %148 = math.exp %147 : vector<8x128xf32>
    %cst_30 = arith.constant 1.000000e+00 : f32
    %149 = vector.broadcast %cst_30 : f32 to vector<8x128xf32>
    %150 = arith.addf %149, %148 : vector<8x128xf32>
    %151 = arith.divf %149, %150 : vector<8x128xf32>
    %152 = arith.mulf %151, %17 : vector<8x128xf32>
    %153 = arith.addf %152, %20 : vector<8x128xf32>
    %154 = vector.extract_strided_slice %153 {offsets = [0, 0], sizes = [8, 32], strides = [1, 1]} : vector<8x128xf32> to vector<8x32xf32>
    %155 = vector.extract_strided_slice %153 {offsets = [0, 32], sizes = [8, 32], strides = [1, 1]} : vector<8x128xf32> to vector<8x32xf32>
    %156 = vector.extract_strided_slice %153 {offsets = [0, 64], sizes = [8, 32], strides = [1, 1]} : vector<8x128xf32> to vector<8x32xf32>
    %157 = vector.extract_strided_slice %153 {offsets = [0, 96], sizes = [8, 32], strides = [1, 1]} : vector<8x128xf32> to vector<8x32xf32>
    %158 = arith.mulf %155, %140 : vector<8x32xf32>
    %159 = arith.mulf %154, %156 : vector<8x32xf32>
    %160 = arith.addf %158, %159 : vector<8x32xf32>
    %161 = math.tanh %160 : vector<8x32xf32>
    %162 = arith.mulf %157, %161 : vector<8x32xf32>
    %163 = vector.extract_strided_slice %8 {offsets = [56, 0], sizes = [8, 128], strides = [1, 1]} : vector<64x128xf32> to vector<8x128xf32>
    %164 = arith.truncf %162 : vector<8x32xf32> to vector<8x32xbf16>
    %cst_31 = arith.constant dense<0.000000e+00> : vector<8x128xf32>
    %165 = tpu.matmul %164, %1, %cst_31 {dimension_numbers = #tpu.dot_dimension_numbers<[1], [0], [0], [1], [0, 0, 1, 1], [], []>} : vector<8x32xbf16>, vector<32x128xbf16>, vector<8x128xf32> -> vector<8x128xf32>
    %166 = arith.addf %163, %165 : vector<8x128xf32>
    %167 = arith.negf %166 : vector<8x128xf32>
    %168 = math.exp %167 : vector<8x128xf32>
    %cst_32 = arith.constant 1.000000e+00 : f32
    %169 = vector.broadcast %cst_32 : f32 to vector<8x128xf32>
    %170 = arith.addf %169, %168 : vector<8x128xf32>
    %171 = arith.divf %169, %170 : vector<8x128xf32>
    %172 = arith.mulf %171, %17 : vector<8x128xf32>
    %173 = arith.addf %172, %20 : vector<8x128xf32>
    %174 = vector.extract_strided_slice %173 {offsets = [0, 0], sizes = [8, 32], strides = [1, 1]} : vector<8x128xf32> to vector<8x32xf32>
    %175 = vector.extract_strided_slice %173 {offsets = [0, 32], sizes = [8, 32], strides = [1, 1]} : vector<8x128xf32> to vector<8x32xf32>
    %176 = vector.extract_strided_slice %173 {offsets = [0, 64], sizes = [8, 32], strides = [1, 1]} : vector<8x128xf32> to vector<8x32xf32>
    %177 = vector.extract_strided_slice %173 {offsets = [0, 96], sizes = [8, 32], strides = [1, 1]} : vector<8x128xf32> to vector<8x32xf32>
    %178 = arith.mulf %175, %160 : vector<8x32xf32>
    %179 = arith.mulf %174, %176 : vector<8x32xf32>
    %180 = arith.addf %178, %179 : vector<8x32xf32>
    %181 = math.tanh %180 : vector<8x32xf32>
    %182 = arith.mulf %177, %181 : vector<8x32xf32>
    %183 = arith.truncf %182 : vector<8x32xf32> to vector<8x32xbf16>
    %cst_33 = arith.constant dense<0.000000e+00> : vector<8x32xf32>
    %184 = tpu.matmul %183, %3, %cst_33 {dimension_numbers = #tpu.dot_dimension_numbers<[1], [0], [0], [1], [0, 0, 1, 1], [], []>} : vector<8x32xbf16>, vector<32x32xbf16>, vector<8x32xf32> -> vector<8x32xf32>
    %185 = vector.broadcast %4 : vector<1x32xf32> to vector<8x32xf32>
    %186 = arith.addf %184, %185 : vector<8x32xf32>
    %cst_34 = arith.constant 0.000000e+00 : f32
    %187 = vector.broadcast %cst_34 : f32 to vector<8x32xf32>
    %188 = arith.maximumf %186, %187 : vector<8x32xf32>
    %189 = vector.extract_strided_slice %188 {offsets = [0, 0], sizes = [2, 32], strides = [1, 1]} : vector<8x32xf32> to vector<2x32xf32>
    %190 = vector.extract_strided_slice %188 {offsets = [2, 0], sizes = [2, 32], strides = [1, 1]} : vector<8x32xf32> to vector<2x32xf32>
    %191 = arith.subf %189, %190 : vector<2x32xf32>
    %192 = arith.mulf %191, %191 : vector<2x32xf32>
    %cst_35 = arith.constant dense<0.000000e+00> : vector<2xf32>
    %193 = vector.multi_reduction <add>, %192, %cst_35 [1] : vector<2x32xf32> to vector<2xf32>
    %194 = math.sqrt %193 : vector<2xf32>
    %195 = vector.shape_cast %194 : vector<2xf32> to vector<1x2xf32>
    %c0_36 = arith.constant 0 : index
    %c0_37 = arith.constant 0 : index
    %196 = vector.load %arg6[%c0_36, %c0_37] : memref<1x2xf32, #tpu.memory_space<vmem>>, vector<1x2xf32>
    tpu.vector_store %arg6[%c0_36, %c0_37], %195 {strides = array<i32>} : memref<1x2xf32, #tpu.memory_space<vmem>>, vector<1x2xf32>,
    return
  }
}

</mosaic_0001>

<llo_original>
// kernel: tpu_custom_call.1
$region0: #{tpu_custom_call.1}
  #allocation0 [shape = 'u32[]', space=smem, size = 0x4, offset = 0x4, fixed_abs, tag = 'smem constant byte address 0x4 - core index']
  #allocation1 [shape = 'u32[144,128]{1,0:T(1,128)}', space=vmem, size = 0x12000, scoped, tag = 'internal scratch']
  %s0 = inlined_call_operand.vmem [shape: bf16[64,16], index: 0, kind: input, shape index: {}]
  %s1 = inlined_call_operand.vmem [shape: bf16[16,128], index: 1, kind: input, shape index: {}]
  %s2 = inlined_call_operand.vmem [shape: bf16[32,128], index: 2, kind: input, shape index: {}]
  %s3 = inlined_call_operand.vmem [shape: f32[1,128], index: 3, kind: input, shape index: {}]
  %s4 = inlined_call_operand.vmem [shape: bf16[32,32], index: 4, kind: input, shape index: {}]
  %s5 = inlined_call_operand.vmem [shape: f32[1,32], index: 5, kind: input, shape index: {}]
  %s6 = inlined_call_operand.hbm [shape: f32[1,2], index: 6, kind: output, shape index: {}]
  %s7 = sld [smem:[#allocation0]]
  $region34: #{tpu_custom_call.1} parent=0
    _
  %s9 = ssub.s32 1, %s7
  %s10 = scalar_select 0, %s9, %s7
  $region1: #{tpu_custom_call.1} parent=0
    #allocation2 [shape = 'u8[512]{0}', space=vmem, size = 0x400, scoped, tag = 'output window, operand 0, single buffered']
    #allocation3 [shape = 's32[1]{0}', space=sflag, size = 0x4, scoped, tag = 'scoped memory for tpu_custom_call.1']
    %11 = vsyncpa [#allocation3], 0
    // Predicated region
    $region2: #{tpu_custom_call.1} parent=1 // pred_check
      _
    $region3: #{tpu_custom_call.1} parent=1 // pred_check_branch
      %13 = sbr.rel (0) target = $region5
    $region4: #{tpu_custom_call.1} parent=1 // pred_region
      _
    $region5: #{tpu_custom_call.1} parent=1 // pred_fallthru
      _
    // Predicated region
    $region6: #{tpu_custom_call.1} parent=1 // pred_check
      _
    $region7: #{tpu_custom_call.1} parent=1 // pred_check_branch
      %15 = sbr.rel (0) target = $region9
    $region8: #{tpu_custom_call.1} parent=1 // pred_region
      _
    $region9: #{tpu_custom_call.1} parent=1 // pred_fallthru
      _
    // Predicated region
    $region10: #{tpu_custom_call.1} parent=1 // pred_check
      _
    $region11: #{tpu_custom_call.1} parent=1 // pred_check_branch
      %17 = sbr.rel (0) target = $region13
    $region12: #{tpu_custom_call.1} parent=1 // pred_region
      _
    $region13: #{tpu_custom_call.1} parent=1 // pred_fallthru
      _
    // Predicated region
    $region14: #{tpu_custom_call.1} parent=1 // pred_check
      _
    $region15: #{tpu_custom_call.1} parent=1 // pred_check_branch
      %19 = sbr.rel (0) target = $region17
    $region16: #{tpu_custom_call.1} parent=1 // pred_region
      _
    $region17: #{tpu_custom_call.1} parent=1 // pred_fallthru
      _
    // Predicated region
    $region18: #{tpu_custom_call.1} parent=1 // pred_check
      _
    $region19: #{tpu_custom_call.1} parent=1 // pred_check_branch
      %21 = sbr.rel (0) target = $region21
    $region20: #{tpu_custom_call.1} parent=1 // pred_region
      _
    $region21: #{tpu_custom_call.1} parent=1 // pred_fallthru
      _
    // Predicated region
    $region22: #{tpu_custom_call.1} parent=1 // pred_check
      _
    $region23: #{tpu_custom_call.1} parent=1 // pred_check_branch
      %23 = sbr.rel (0) target = $region25
    $region24: #{tpu_custom_call.1} parent=1 // pred_region
      _
    $region25: #{tpu_custom_call.1} parent=1 // pred_fallthru
      _
    %v25 = vld [vmem:[%s1] sm:$0xf]
    %v26 = vld [vmem:[%s1 + $0x4] sm:$0xf]
    %v27 = vld [vmem:[%s2] sm:$0xf]
    %v28 = vld [vmem:[%s2 + $0x4] sm:$0xf]
    %v29 = vld [vmem:[%s2 + $0x8] sm:$0xf]
    %v30 = vld [vmem:[%s2 + $0xc] sm:$0xf]
    %v31 = vld [vmem:[%s3] sm:$0x1]
    %v32 = vld [vmem:[%s4] sm:$0xf]
    %v33 = vld [vmem:[%s4 + $0x4] sm:$0xf]
    %v34 = vld [vmem:[%s4 + $0x8] sm:$0xf]
    %v35 = vld [vmem:[%s4 + $0xc] sm:$0xf]
    %v36 = vld [vmem:[%s5] sm:$0x1]
    %v37 = vld [vmem:[%s0] sm:$0xf]
    %v38 = vld [vmem:[%s0 + $0x4] sm:$0xf]
    %v39 = vld [vmem:[%s0 + $0x8] sm:$0xf]
    %v40 = vld [vmem:[%s0 + $0xc] sm:$0xf]
    %v41 = vld [vmem:[%s0 + $0x10] sm:$0xf]
    %v42 = vld [vmem:[%s0 + $0x14] sm:$0xf]
    %v43 = vld [vmem:[%s0 + $0x18] sm:$0xf]
    %v44 = vld [vmem:[%s0 + $0x1c] sm:$0xf]
    %v46 = vlaneseq
    %v47 = vshrl.u32 %v46, 7
    %v48 = vsub.s32 0, %v47
    %v49 = vrot.slane %v31, %v48
    %v59 = vunpack.c.l.b16 %v37
    %v60 = vunpack.c.l.b16 %v38
    %v61 = vunpack.c.l.b16 %v39
    %v62 = vunpack.c.l.b16 %v40
    %v63 = vunpack.c.l.b16 %v41
    %v64 = vunpack.c.l.b16 %v42
    %v65 = vunpack.c.l.b16 %v43
    %v66 = vunpack.c.l.b16 %v44
    %v67 = vpack.c.b16 %v60, %v59
    %v68 = vpack.c.b16 %v62, %v61
    %v69 = vpack.c.b16 %v64, %v63
    %v70 = vpack.c.b16 %v66, %v65
    %v73 = vunpack.c.l.b16 %v25
    %v74 = vunpack.c.l.b16 %v26
    %v75 = vpack.c.b16 %v74, %v73
    %vm77 = vcmask 130048
    %v79 = vsel %vm77, %v67, 0
    %v82 = vsel %vm77, %v68, 0
    %v85 = vsel %vm77, %v69, 0
    %v88 = vsel %vm77, %v70, 0
    %90 = vmatprep.subr.bf16.mxu0 0
    %91 = vmatpush1.bf16.msra.mxu0 0
    %92 = vmatprep.subr.bf16.mxu0 0
    %93 = vmatpush1.bf16.msra.mxu0 0
    %94 = vmatprep.subr.bf16.mxu0 0
    %95 = vmatpush1.bf16.msra.mxu0 0
    %96 = vmatprep.subr.bf16.mxu0 0
    %97 = vmatpush1.bf16.msra.mxu0 0
    %98 = vmatprep.subr.bf16.mxu0 0
    %99 = vmatpush1.bf16.msra.mxu0 0
    %100 = vmatprep.subr.bf16.mxu0 0
    %101 = vmatpush1.bf16.msra.mxu0 0
    %102 = vmatprep.subr.bf16.mxu0 0
    %103 = vmatpush1.bf16.msra.mxu0 0
    %104 = vmatprep.subr.bf16.mxu0 0
    %105 = vmatpush1.bf16.msra.mxu0 %v75
    %106 = vmatprep.subr.bf16.mxu0 0
    %107 = vmatpush2.bf16.msra.mxu0 0
    %108 = vmatprep.subr.bf16.mxu0 0
    %109 = vmatpush2.bf16.msra.mxu0 0
    %110 = vmatprep.subr.bf16.mxu0 0
    %111 = vmatpush2.bf16.msra.mxu0 0
    %112 = vmatprep.subr.bf16.mxu0 0
    %113 = vmatpush2.bf16.msra.mxu0 0
    %114 = vmatprep.subr.bf16.mxu0 0
    %115 = vmatpush2.bf16.msra.mxu0 0
    %116 = vmatprep.subr.bf16.mxu0 0
    %117 = vmatpush2.bf16.msra.mxu0 0
    %118 = vmatprep.subr.bf16.mxu0 0
    %119 = vmatpush2.bf16.msra.mxu0 0
    %120 = vmatprep.subr.bf16.mxu0 0
    %121 = vmatpush2.bf16.msra.mxu0 0
    %122 = vmatprep.mubr.bf16.mxu0 0
    %123 = vmatmul.mubr.bf16.gmra.mxu0 %v79
    %v124 = vpop.f32.mrf.mxu0
    %v125 = vadd.f32 %v49, %v124
    %v126 = vpop.f32.mrf.mxu0
    %v127 = vpop.f32.mrf.mxu0
    %v128 = vadd.f32 %v49, %v127
    %v129 = vpop.f32.mrf.mxu0
    %130 = vmatprep.mubr.bf16.mxu0 0
    %131 = vmatmul.mubr.bf16.gmra.mxu0 %v82
    %v132 = vpop.f32.mrf.mxu0
    %v133 = vadd.f32 %v49, %v132
    %v134 = vpop.f32.mrf.mxu0
    %v135 = vpop.f32.mrf.mxu0
    %v136 = vadd.f32 %v49, %v135
    %v137 = vpop.f32.mrf.mxu0
    %138 = vmatprep.mubr.bf16.mxu0 0
    %139 = vmatmul.mubr.bf16.gmra.mxu0 %v85
    %v140 = vpop.f32.mrf.mxu0
    %v141 = vadd.f32 %v49, %v140
    %v142 = vpop.f32.mrf.mxu0
    %v143 = vpop.f32.mrf.mxu0
    %v144 = vadd.f32 %v49, %v143
    %v145 = vpop.f32.mrf.mxu0
    %146 = vmatprep.mubr.bf16.mxu0 0
    %147 = vmatmul.mubr.bf16.gmra.mxu0 %v88
    %v148 = vpop.f32.mrf.mxu0
    %v149 = vadd.f32 %v49, %v148
    %v150 = vpop.f32.mrf.mxu0
    %v151 = vpop.f32.mrf.mxu0
    %v152 = vadd.f32 %v49, %v151
    %v153 = vpop.f32.mrf.mxu0
    %154 = vdwg.mxu0
    %v155 = vlaneseq
    %v156 = vand.u32 %v155, 127
    %vm157 = vcmp.ge.s32.totalorder %v156, 64
    %vm158 = vcmp.lt.s32.totalorder %v156, 96
    %vm159 = vmand %vm157, %vm158
    %v160 = vsel %vm159, 2.0, 1.0
    %v161 = vsel %vm159, -1.0, 0.0
    %v166 = vunpack.c.l.b16 %v27
    %v167 = vunpack.c.l.b16 %v28
    %v168 = vunpack.c.l.b16 %v29
    %v169 = vunpack.c.l.b16 %v30
    %v170 = vpack.c.b16 %v167, %v166
    %v171 = vpack.c.b16 %v169, %v168
    %vm174 = vcmask 261120
    %v176 = vsel %vm174, 0, 0
    %178 = vmatprep.subr.bf16.mxu0 0
    %179 = vmatpush1.bf16.msra.mxu0 0
    %180 = vmatprep.subr.bf16.mxu0 0
    %181 = vmatpush1.bf16.msra.mxu0 0
    %182 = vmatprep.subr.bf16.mxu0 0
    %183 = vmatpush1.bf16.msra.mxu0 0
    %184 = vmatprep.subr.bf16.mxu0 0
    %185 = vmatpush1.bf16.msra.mxu0 0
    %186 = vmatprep.subr.bf16.mxu0 0
    %187 = vmatpush1.bf16.msra.mxu0 0
    %188 = vmatprep.subr.bf16.mxu0 0
    %189 = vmatpush1.bf16.msra.mxu0 0
    %190 = vmatprep.subr.bf16.mxu0 0
    %191 = vmatpush1.bf16.msra.mxu0 %v171
    %192 = vmatprep.subr.bf16.mxu0 0
    %193 = vmatpush1.bf16.msra.mxu0 %v170
    %194 = vmatprep.subr.bf16.mxu0 0
    %195 = vmatpush2.bf16.msra.mxu0 0
    %196 = vmatprep.subr.bf16.mxu0 0
    %197 = vmatpush2.bf16.msra.mxu0 0
    %198 = vmatprep.subr.bf16.mxu0 0
    %199 = vmatpush2.bf16.msra.mxu0 0
    %200 = vmatprep.subr.bf16.mxu0 0
    %201 = vmatpush2.bf16.msra.mxu0 0
    %202 = vmatprep.subr.bf16.mxu0 0
    %203 = vmatpush2.bf16.msra.mxu0 0
    %204 = vmatprep.subr.bf16.mxu0 0
    %205 = vmatpush2.bf16.msra.mxu0 0
    %206 = vmatprep.subr.bf16.mxu0 0
    %207 = vmatpush2.bf16.msra.mxu0 0
    %208 = vmatprep.subr.bf16.mxu0 0
    %209 = vmatpush2.bf16.msra.mxu0 0
    %210 = vmatprep.mubr.bf16.mxu0 0
    %211 = vmatmul.mubr.bf16.gmra.mxu0 %v176
    %v212 = vpop.f32.mrf.mxu0
    %v213 = vadd.f32 0.0, %v212
    %v214 = vpop.f32.mrf.mxu0
    %v215 = vpop.f32.mrf.mxu0
    %v216 = vpop.f32.mrf.mxu0
    %217 = vdwg.mxu0
    %v218 = vadd.f32 %v125, %v213
    %v219 = vxor.u32 %v218, 2147483648
    %v220 = vmul.f32 %v219, 1.442695
    %v221 = vpow.pop %v220
    %v222 = vadd.f32 %v221, 1.0
    %v223 = vrcp.pop %v222
    %v224 = vmul.f32 1.0, %v223
    %v225 = vmul.f32 %v224, %v160
    %v226 = vadd.f32 %v225, %v161
    %v227 = vmul.f32 %v226, 0.0
    %229 = vrot.lane.b32.xlu0 %v226, 64
    %v230 = vpop.permute.xlu0 %229
    %v232 = vmul.f32 %v226, %v230
    %234 = vrot.lane.b32.xlu0 %v232, 32
    %v235 = vpop.permute.xlu0 %234
    %v237 = vadd.f32 %v227, %v235
    %v238 = vtanh.pop %v237
    %240 = vrot.lane.b32.xlu0 %v238, 64
    %v241 = vpop.permute.xlu0 %240
    %v243 = vmul.f32 %v226, %v241
    %v244 = vpack.c.bf16 %v243, %v243
    %246 = vrot.lane.b32.xlu0 %v244, 32
    %v247 = vpop.permute.xlu0 %246
    %v249 = vsel %vm174, %v247, 0
    %251 = vmatprep.subr.bf16.mxu0 0
    %252 = vmatpush1.bf16.msra.mxu0 0
    %253 = vmatprep.subr.bf16.mxu0 0
    %254 = vmatpush1.bf16.msra.mxu0 0
    %255 = vmatprep.subr.bf16.mxu0 0
    %256 = vmatpush1.bf16.msra.mxu0 0
    %257 = vmatprep.subr.bf16.mxu0 0
    %258 = vmatpush1.bf16.msra.mxu0 0
    %259 = vmatprep.subr.bf16.mxu0 0
    %260 = vmatpush1.bf16.msra.mxu0 0
    %261 = vmatprep.subr.bf16.mxu0 0
    %262 = vmatpush1.bf16.msra.mxu0 0
    %263 = vmatprep.subr.bf16.mxu0 0
    %264 = vmatpush1.bf16.msra.mxu0 %v171
    %265 = vmatprep.subr.bf16.mxu0 0
    %266 = vmatpush1.bf16.msra.mxu0 %v170
    %267 = vmatprep.subr.bf16.mxu0 0
    %268 = vmatpush2.bf16.msra.mxu0 0
    %269 = vmatprep.subr.bf16.mxu0 0
    %270 = vmatpush2.bf16.msra.mxu0 0
    %271 = vmatprep.subr.bf16.mxu0 0
    %272 = vmatpush2.bf16.msra.mxu0 0
    %273 = vmatprep.subr.bf16.mxu0 0
    %274 = vmatpush2.bf16.msra.mxu0 0
    %275 = vmatprep.subr.bf16.mxu0 0
    %276 = vmatpush2.bf16.msra.mxu0 0
    %277 = vmatprep.subr.bf16.mxu0 0
    %278 = vmatpush2.bf16.msra.mxu0 0
    %279 = vmatprep.subr.bf16.mxu0 0
    %280 = vmatpush2.bf16.msra.mxu0 0
    %281 = vmatprep.subr.bf16.mxu0 0
    %282 = vmatpush2.bf16.msra.mxu0 0
    %283 = vmatprep.mubr.bf16.mxu0 0
    %284 = vmatmul.mubr.bf16.gmra.mxu0 %v249
    %v285 = vpop.f32.mrf.mxu0
    %v286 = vadd.f32 0.0, %v285
    %v287 = vpop.f32.mrf.mxu0
    %v288 = vpop.f32.mrf.mxu0
    %v289 = vpop.f32.mrf.mxu0
    %290 = vdwg.mxu0
    %v291 = vadd.f32 %v128, %v286
    %v292 = vxor.u32 %v291, 2147483648
    %v293 = vmul.f32 %v292, 1.442695
    %v294 = vpow.pop %v293
    %v295 = vadd.f32 %v294, 1.0
    %v296 = vrcp.pop %v295
    %v297 = vmul.f32 1.0, %v296
    %v298 = vmul.f32 %v297, %v160
    %v299 = vadd.f32 %v298, %v161
    %v300 = vmul.f32 %v299, %v237
    %302 = vrot.lane.b32.xlu0 %v299, 64
    %v303 = vpop.permute.xlu0 %302
    %v305 = vmul.f32 %v299, %v303
    %307 = vrot.lane.b32.xlu0 %v305, 32
    %v308 = vpop.permute.xlu0 %307
    %v310 = vadd.f32 %v300, %v308
    %v311 = vtanh.pop %v310
    %313 = vrot.lane.b32.xlu0 %v311, 64
    %v314 = vpop.permute.xlu0 %313
    %v316 = vmul.f32 %v299, %v314
    %v317 = vpack.c.bf16 %v316, %v316
    %319 = vrot.lane.b32.xlu0 %v317, 32
    %v320 = vpop.permute.xlu0 %319
    %v322 = vsel %vm174, %v320, 0
    %324 = vmatprep.subr.bf16.mxu0 0
    %325 = vmatpush1.bf16.msra.mxu0 0
    %326 = vmatprep.subr.bf16.mxu0 0
    %327 = vmatpush1.bf16.msra.mxu0 0
    %328 = vmatprep.subr.bf16.mxu0 0
    %329 = vmatpush1.bf16.msra.mxu0 0
    %330 = vmatprep.subr.bf16.mxu0 0
    %331 = vmatpush1.bf16.msra.mxu0 0
    %332 = vmatprep.subr.bf16.mxu0 0
    %333 = vmatpush1.bf16.msra.mxu0 0
    %334 = vmatprep.subr.bf16.mxu0 0
    %335 = vmatpush1.bf16.msra.mxu0 0
    %336 = vmatprep.subr.bf16.mxu0 0
    %337 = vmatpush1.bf16.msra.mxu0 %v171
    %338 = vmatprep.subr.bf16.mxu0 0
    %339 = vmatpush1.bf16.msra.mxu0 %v170
    %340 = vmatprep.subr.bf16.mxu0 0
    %341 = vmatpush2.bf16.msra.mxu0 0
    %342 = vmatprep.subr.bf16.mxu0 0
    %343 = vmatpush2.bf16.msra.mxu0 0
    %344 = vmatprep.subr.bf16.mxu0 0
    %345 = vmatpush2.bf16.msra.mxu0 0
    %346 = vmatprep.subr.bf16.mxu0 0
    %347 = vmatpush2.bf16.msra.mxu0 0
    %348 = vmatprep.subr.bf16.mxu0 0
    %349 = vmatpush2.bf16.msra.mxu0 0
    %350 = vmatprep.subr.bf16.mxu0 0
    %351 = vmatpush2.bf16.msra.mxu0 0
    %352 = vmatprep.subr.bf16.mxu0 0
    %353 = vmatpush2.bf16.msra.mxu0 0
    %354 = vmatprep.subr.bf16.mxu0 0
    %355 = vmatpush2.bf16.msra.mxu0 0
    %356 = vmatprep.mubr.bf16.mxu0 0
    %357 = vmatmul.mubr.bf16.gmra.mxu0 %v322
    %v358 = vpop.f32.mrf.mxu0
    %v359 = vadd.f32 0.0, %v358
    %v360 = vpop.f32.mrf.mxu0
    %v361 = vpop.f32.mrf.mxu0
    %v362 = vpop.f32.mrf.mxu0
    %363 = vdwg.mxu0
    %v364 = vadd.f32 %v133, %v359
    %v365 = vxor.u32 %v364, 2147483648
    %v366 = vmul.f32 %v365, 1.442695
    %v367 = vpow.pop %v366
    %v368 = vadd.f32 %v367, 1.0
    %v369 = vrcp.pop %v368
    %v370 = vmul.f32 1.0, %v369
    %v371 = vmul.f32 %v370, %v160
    %v372 = vadd.f32 %v371, %v161
    %v373 = vmul.f32 %v372, %v310
    %375 = vrot.lane.b32.xlu0 %v372, 64
    %v376 = vpop.permute.xlu0 %375
    %v378 = vmul.f32 %v372, %v376
    %380 = vrot.lane.b32.xlu0 %v378, 32
    %v381 = vpop.permute.xlu0 %380
    %v383 = vadd.f32 %v373, %v381
    %v384 = vtanh.pop %v383
    %386 = vrot.lane.b32.xlu0 %v384, 64
    %v387 = vpop.permute.xlu0 %386
    %v389 = vmul.f32 %v372, %v387
    %v390 = vpack.c.bf16 %v389, %v389
    %392 = vrot.lane.b32.xlu0 %v390, 32
    %v393 = vpop.permute.xlu0 %392
    %v395 = vsel %vm174, %v393, 0
    %397 = vmatprep.subr.bf16.mxu0 0
    %398 = vmatpush1.bf16.msra.mxu0 0
    %399 = vmatprep.subr.bf16.mxu0 0
    %400 = vmatpush1.bf16.msra.mxu0 0
    %401 = vmatprep.subr.bf16.mxu0 0
    %402 = vmatpush1.bf16.msra.mxu0 0
    %403 = vmatprep.subr.bf16.mxu0 0
    %404 = vmatpush1.bf16.msra.mxu0 0
    %405 = vmatprep.subr.bf16.mxu0 0
    %406 = vmatpush1.bf16.msra.mxu0 0
    %407 = vmatprep.subr.bf16.mxu0 0
    %408 = vmatpush1.bf16.msra.mxu0 0
    %409 = vmatprep.subr.bf16.mxu0 0
    %410 = vmatpush1.bf16.msra.mxu0 %v171
    %411 = vmatprep.subr.bf16.mxu0 0
    %412 = vmatpush1.bf16.msra.mxu0 %v170
    %413 = vmatprep.subr.bf16.mxu0 0
    %414 = vmatpush2.bf16.msra.mxu0 0
    %415 = vmatprep.subr.bf16.mxu0 0
    %416 = vmatpush2.bf16.msra.mxu0 0
    %417 = vmatprep.subr.bf16.mxu0 0
    %418 = vmatpush2.bf16.msra.mxu0 0
    %419 = vmatprep.subr.bf16.mxu0 0
    %420 = vmatpush2.bf16.msra.mxu0 0
    %421 = vmatprep.subr.bf16.mxu0 0
    %422 = vmatpush2.bf16.msra.mxu0 0
    %423 = vmatprep.subr.bf16.mxu0 0
    %424 = vmatpush2.bf16.msra.mxu0 0
    %425 = vmatprep.subr.bf16.mxu0 0
    %426 = vmatpush2.bf16.msra.mxu0 0
    %427 = vmatprep.subr.bf16.mxu0 0
    %428 = vmatpush2.bf16.msra.mxu0 0
    %429 = vmatprep.mubr.bf16.mxu0 0
    %430 = vmatmul.mubr.bf16.gmra.mxu0 %v395
    %v431 = vpop.f32.mrf.mxu0
    %v432 = vadd.f32 0.0, %v431
    %v433 = vpop.f32.mrf.mxu0
    %v434 = vpop.f32.mrf.mxu0
    %v435 = vpop.f32.mrf.mxu0
    %436 = vdwg.mxu0
    %v437 = vadd.f32 %v136, %v432
    %v438 = vxor.u32 %v437, 2147483648
    %v439 = vmul.f32 %v438, 1.442695
    %v440 = vpow.pop %v439
    %v441 = vadd.f32 %v440, 1.0
    %v442 = vrcp.pop %v441
    %v443 = vmul.f32 1.0, %v442
    %v444 = vmul.f32 %v443, %v160
    %v445 = vadd.f32 %v444, %v161
    %v446 = vmul.f32 %v445, %v383
    %448 = vrot.lane.b32.xlu0 %v445, 64
    %v449 = vpop.permute.xlu0 %448
    %v451 = vmul.f32 %v445, %v449
    %453 = vrot.lane.b32.xlu0 %v451, 32
    %v454 = vpop.permute.xlu0 %453
    %v456 = vadd.f32 %v446, %v454
    %v457 = vtanh.pop %v456
    %459 = vrot.lane.b32.xlu0 %v457, 64
    %v460 = vpop.permute.xlu0 %459
    %v462 = vmul.f32 %v445, %v460
    %v463 = vpack.c.bf16 %v462, %v462
    %465 = vrot.lane.b32.xlu0 %v463, 32
    %v466 = vpop.permute.xlu0 %465
    %v468 = vsel %vm174, %v466, 0
    %470 = vmatprep.subr.bf16.mxu0 0
    %471 = vmatpush1.bf16.msra.mxu0 0
    %472 = vmatprep.subr.bf16.mxu0 0
    %473 = vmatpush1.bf16.msra.mxu0 0
    %474 = vmatprep.subr.bf16.mxu0 0
    %475 = vmatpush1.bf16.msra.mxu0 0
    %476 = vmatprep.subr.bf16.mxu0 0
    %477 = vmatpush1.bf16.msra.mxu0 0
    %478 = vmatprep.subr.bf16.mxu0 0
    %479 = vmatpush1.bf16.msra.mxu0 0
    %480 = vmatprep.subr.bf16.mxu0 0
    %481 = vmatpush1.bf16.msra.mxu0 0
    %482 = vmatprep.subr.bf16.mxu0 0
    %483 = vmatpush1.bf16.msra.mxu0 %v171
    %484 = vmatprep.subr.bf16.mxu0 0
    %485 = vmatpush1.bf16.msra.mxu0 %v170
    %486 = vmatprep.subr.bf16.mxu0 0
    %487 = vmatpush2.bf16.msra.mxu0 0
    %488 = vmatprep.subr.bf16.mxu0 0
    %489 = vmatpush2.bf16.msra.mxu0 0
    %490 = vmatprep.subr.bf16.mxu0 0
    %491 = vmatpush2.bf16.msra.mxu0 0
    %492 = vmatprep.subr.bf16.mxu0 0
    %493 = vmatpush2.bf16.msra.mxu0 0
    %494 = vmatprep.subr.bf16.mxu0 0
    %495 = vmatpush2.bf16.msra.mxu0 0
    %496 = vmatprep.subr.bf16.mxu0 0
    %497 = vmatpush2.bf16.msra.mxu0 0
    %498 = vmatprep.subr.bf16.mxu0 0
    %499 = vmatpush2.bf16.msra.mxu0 0
    %500 = vmatprep.subr.bf16.mxu0 0
    %501 = vmatpush2.bf16.msra.mxu0 0
    %502 = vmatprep.mubr.bf16.mxu0 0
    %503 = vmatmul.mubr.bf16.gmra.mxu0 %v468
    %v504 = vpop.f32.mrf.mxu0
    %v505 = vadd.f32 0.0, %v504
    %v506 = vpop.f32.mrf.mxu0
    %v507 = vpop.f32.mrf.mxu0
    %v508 = vpop.f32.mrf.mxu0
    %509 = vdwg.mxu0
    %v510 = vadd.f32 %v141, %v505
    %v511 = vxor.u32 %v510, 2147483648
    %v512 = vmul.f32 %v511, 1.442695
    %v513 = vpow.pop %v512
    %v514 = vadd.f32 %v513, 1.0
    %v515 = vrcp.pop %v514
    %v516 = vmul.f32 1.0, %v515
    %v517 = vmul.f32 %v516, %v160
    %v518 = vadd.f32 %v517, %v161
    %v519 = vmul.f32 %v518, %v456
    %521 = vrot.lane.b32.xlu0 %v518, 64
    %v522 = vpop.permute.xlu0 %521
    %v524 = vmul.f32 %v518, %v522
    %526 = vrot.lane.b32.xlu0 %v524, 32
    %v527 = vpop.permute.xlu0 %526
    %v529 = vadd.f32 %v519, %v527
    %v530 = vtanh.pop %v529
    %532 = vrot.lane.b32.xlu0 %v530, 64
    %v533 = vpop.permute.xlu0 %532
    %v535 = vmul.f32 %v518, %v533
    %v536 = vpack.c.bf16 %v535, %v535
    %538 = vrot.lane.b32.xlu0 %v536, 32
    %v539 = vpop.permute.xlu0 %538
    %v541 = vsel %vm174, %v539, 0
    %543 = vmatprep.subr.bf16.mxu0 0
    %544 = vmatpush1.bf16.msra.mxu0 0
    %545 = vmatprep.subr.bf16.mxu0 0
    %546 = vmatpush1.bf16.msra.mxu0 0
    %547 = vmatprep.subr.bf16.mxu0 0
    %548 = vmatpush1.bf16.msra.mxu0 0
    %549 = vmatprep.subr.bf16.mxu0 0
    %550 = vmatpush1.bf16.msra.mxu0 0
    %551 = vmatprep.subr.bf16.mxu0 0
    %552 = vmatpush1.bf16.msra.mxu0 0
    %553 = vmatprep.subr.bf16.mxu0 0
    %554 = vmatpush1.bf16.msra.mxu0 0
    %555 = vmatprep.subr.bf16.mxu0 0
    %556 = vmatpush1.bf16.msra.mxu0 %v171
    %557 = vmatprep.subr.bf16.mxu0 0
    %558 = vmatpush1.bf16.msra.mxu0 %v170
    %559 = vmatprep.subr.bf16.mxu0 0
    %560 = vmatpush2.bf16.msra.mxu0 0
    %561 = vmatprep.subr.bf16.mxu0 0
    %562 = vmatpush2.bf16.msra.mxu0 0
    %563 = vmatprep.subr.bf16.mxu0 0
    %564 = vmatpush2.bf16.msra.mxu0 0
    %565 = vmatprep.subr.bf16.mxu0 0
    %566 = vmatpush2.bf16.msra.mxu0 0
    %567 = vmatprep.subr.bf16.mxu0 0
    %568 = vmatpush2.bf16.msra.mxu0 0
    %569 = vmatprep.subr.bf16.mxu0 0
    %570 = vmatpush2.bf16.msra.mxu0 0
    %571 = vmatprep.subr.bf16.mxu0 0
    %572 = vmatpush2.bf16.msra.mxu0 0
    %573 = vmatprep.subr.bf16.mxu0 0
    %574 = vmatpush2.bf16.msra.mxu0 0
    %575 = vmatprep.mubr.bf16.mxu0 0
    %576 = vmatmul.mubr.bf16.gmra.mxu0 %v541
    %v577 = vpop.f32.mrf.mxu0
    %v578 = vadd.f32 0.0, %v577
    %v579 = vpop.f32.mrf.mxu0
    %v580 = vpop.f32.mrf.mxu0
    %v581 = vpop.f32.mrf.mxu0
    %582 = vdwg.mxu0
    %v583 = vadd.f32 %v144, %v578
    %v584 = vxor.u32 %v583, 2147483648
    %v585 = vmul.f32 %v584, 1.442695
    %v586 = vpow.pop %v585
    %v587 = vadd.f32 %v586, 1.0
    %v588 = vrcp.pop %v587
    %v589 = vmul.f32 1.0, %v588
    %v590 = vmul.f32 %v589, %v160
    %v591 = vadd.f32 %v590, %v161
    %v592 = vmul.f32 %v591, %v529
    %594 = vrot.lane.b32.xlu0 %v591, 64
    %v595 = vpop.permute.xlu0 %594
    %v597 = vmul.f32 %v591, %v595
    %599 = vrot.lane.b32.xlu0 %v597, 32
    %v600 = vpop.permute.xlu0 %599
    %v602 = vadd.f32 %v592, %v600
    %v603 = vtanh.pop %v602
    %605 = vrot.lane.b32.xlu0 %v603, 64
    %v606 = vpop.permute.xlu0 %605
    %v608 = vmul.f32 %v591, %v606
    %v609 = vpack.c.bf16 %v608, %v608
    %611 = vrot.lane.b32.xlu0 %v609, 32
    %v612 = vpop.permute.xlu0 %611
    %v614 = vsel %vm174, %v612, 0
    %616 = vmatprep.subr.bf16.mxu0 0
    %617 = vmatpush1.bf16.msra.mxu0 0
    %618 = vmatprep.subr.bf16.mxu0 0
    %619 = vmatpush1.bf16.msra.mxu0 0
    %620 = vmatprep.subr.bf16.mxu0 0
    %621 = vmatpush1.bf16.msra.mxu0 0
    %622 = vmatprep.subr.bf16.mxu0 0
    %623 = vmatpush1.bf16.msra.mxu0 0
    %624 = vmatprep.subr.bf16.mxu0 0
    %625 = vmatpush1.bf16.msra.mxu0 0
    %626 = vmatprep.subr.bf16.mxu0 0
    %627 = vmatpush1.bf16.msra.mxu0 0
    %628 = vmatprep.subr.bf16.mxu0 0
    %629 = vmatpush1.bf16.msra.mxu0 %v171
    %630 = vmatprep.subr.bf16.mxu0 0
    %631 = vmatpush1.bf16.msra.mxu0 %v170
    %632 = vmatprep.subr.bf16.mxu0 0
    %633 = vmatpush2.bf16.msra.mxu0 0
    %634 = vmatprep.subr.bf16.mxu0 0
    %635 = vmatpush2.bf16.msra.mxu0 0
    %636 = vmatprep.subr.bf16.mxu0 0
    %637 = vmatpush2.bf16.msra.mxu0 0
    %638 = vmatprep.subr.bf16.mxu0 0
    %639 = vmatpush2.bf16.msra.mxu0 0
    %640 = vmatprep.subr.bf16.mxu0 0
    %641 = vmatpush2.bf16.msra.mxu0 0
    %642 = vmatprep.subr.bf16.mxu0 0
    %643 = vmatpush2.bf16.msra.mxu0 0
    %644 = vmatprep.subr.bf16.mxu0 0
    %645 = vmatpush2.bf16.msra.mxu0 0
    %646 = vmatprep.subr.bf16.mxu0 0
    %647 = vmatpush2.bf16.msra.mxu0 0
    %648 = vmatprep.mubr.bf16.mxu0 0
    %649 = vmatmul.mubr.bf16.gmra.mxu0 %v614
    %v650 = vpop.f32.mrf.mxu0
    %v651 = vadd.f32 0.0, %v650
    %v652 = vpop.f32.mrf.mxu0
    %v653 = vpop.f32.mrf.mxu0
    %v654 = vpop.f32.mrf.mxu0
    %655 = vdwg.mxu0
    %v656 = vadd.f32 %v149, %v651
    %v657 = vxor.u32 %v656, 2147483648
    %v658 = vmul.f32 %v657, 1.442695
    %v659 = vpow.pop %v658
    %v660 = vadd.f32 %v659, 1.0
    %v661 = vrcp.pop %v660
    %v662 = vmul.f32 1.0, %v661
    %v663 = vmul.f32 %v662, %v160
    %v664 = vadd.f32 %v663, %v161
    %v665 = vmul.f32 %v664, %v602
    %667 = vrot.lane.b32.xlu0 %v664, 64
    %v668 = vpop.permute.xlu0 %667
    %v670 = vmul.f32 %v664, %v668
    %672 = vrot.lane.b32.xlu0 %v670, 32
    %v673 = vpop.permute.xlu0 %672
    %v675 = vadd.f32 %v665, %v673
    %v676 = vtanh.pop %v675
    %678 = vrot.lane.b32.xlu0 %v676, 64
    %v679 = vpop.permute.xlu0 %678
    %v681 = vmul.f32 %v664, %v679
    %v682 = vpack.c.bf16 %v681, %v681
    %684 = vrot.lane.b32.xlu0 %v682, 32
    %v685 = vpop.permute.xlu0 %684
    %v687 = vsel %vm174, %v685, 0
    %689 = vmatprep.subr.bf16.mxu0 0
    %690 = vmatpush1.bf16.msra.mxu0 0
    %691 = vmatprep.subr.bf16.mxu0 0
    %692 = vmatpush1.bf16.msra.mxu0 0
    %693 = vmatprep.subr.bf16.mxu0 0
    %694 = vmatpush1.bf16.msra.mxu0 0
    %695 = vmatprep.subr.bf16.mxu0 0
    %696 = vmatpush1.bf16.msra.mxu0 0
    %697 = vmatprep.subr.bf16.mxu0 0
    %698 = vmatpush1.bf16.msra.mxu0 0
    %699 = vmatprep.subr.bf16.mxu0 0
    %700 = vmatpush1.bf16.msra.mxu0 0
    %701 = vmatprep.subr.bf16.mxu0 0
    %702 = vmatpush1.bf16.msra.mxu0 %v171
    %703 = vmatprep.subr.bf16.mxu0 0
    %704 = vmatpush1.bf16.msra.mxu0 %v170
    %705 = vmatprep.subr.bf16.mxu0 0
    %706 = vmatpush2.bf16.msra.mxu0 0
    %707 = vmatprep.subr.bf16.mxu0 0
    %708 = vmatpush2.bf16.msra.mxu0 0
    %709 = vmatprep.subr.bf16.mxu0 0
    %710 = vmatpush2.bf16.msra.mxu0 0
    %711 = vmatprep.subr.bf16.mxu0 0
    %712 = vmatpush2.bf16.msra.mxu0 0
    %713 = vmatprep.subr.bf16.mxu0 0
    %714 = vmatpush2.bf16.msra.mxu0 0
    %715 = vmatprep.subr.bf16.mxu0 0
    %716 = vmatpush2.bf16.msra.mxu0 0
    %717 = vmatprep.subr.bf16.mxu0 0
    %718 = vmatpush2.bf16.msra.mxu0 0
    %719 = vmatprep.subr.bf16.mxu0 0
    %720 = vmatpush2.bf16.msra.mxu0 0
    %721 = vmatprep.mubr.bf16.mxu0 0
    %722 = vmatmul.mubr.bf16.gmra.mxu0 %v687
    %v723 = vpop.f32.mrf.mxu0
    %v724 = vadd.f32 0.0, %v723
    %v725 = vpop.f32.mrf.mxu0
    %v726 = vpop.f32.mrf.mxu0
    %v727 = vpop.f32.mrf.mxu0
    %728 = vdwg.mxu0
    %v729 = vadd.f32 %v152, %v724
    %v730 = vxor.u32 %v729, 2147483648
    %v731 = vmul.f32 %v730, 1.442695
    %v732 = vpow.pop %v731
    %v733 = vadd.f32 %v732, 1.0
    %v734 = vrcp.pop %v733
    %v735 = vmul.f32 1.0, %v734
    %v736 = vmul.f32 %v735, %v160
    %v737 = vadd.f32 %v736, %v161
    %v738 = vmul.f32 %v737, %v675
    %740 = vrot.lane.b32.xlu0 %v737, 64
    %v741 = vpop.permute.xlu0 %740
    %v743 = vmul.f32 %v737, %v741
    %745 = vrot.lane.b32.xlu0 %v743, 32
    %v746 = vpop.permute.xlu0 %745
    %v748 = vadd.f32 %v738, %v746
    %v749 = vtanh.pop %v748
    %751 = vrot.lane.b32.xlu0 %v749, 64
    %v752 = vpop.permute.xlu0 %751
    %v754 = vmul.f32 %v737, %v752
    %v755 = vpack.c.bf16 %v754, %v754
    %v757 = vlaneseq
    %v758 = vshrl.u32 %v757, 7
    %v759 = vsub.s32 0, %v758
    %v760 = vrot.slane %v36, %v759
    %763 = vrot.lane.b32.xlu0 %v755, 32
    %v764 = vpop.permute.xlu0 %763
    %v769 = vunpack.c.l.b16 %v32
    %v770 = vunpack.c.l.b16 %v33
    %v771 = vunpack.c.l.b16 %v34
    %v772 = vunpack.c.l.b16 %v35
    %v773 = vpack.c.b16 %v770, %v769
    %v774 = vpack.c.b16 %v772, %v771
    %v778 = vsel %vm174, %v764, 0
    %780 = vmatprep.subr.bf16.mxu0 0
    %781 = vmatpush1.bf16.msra.mxu0 0
    %782 = vmatprep.subr.bf16.mxu0 0
    %783 = vmatpush1.bf16.msra.mxu0 0
    %784 = vmatprep.subr.bf16.mxu0 0
    %785 = vmatpush1.bf16.msra.mxu0 0
    %786 = vmatprep.subr.bf16.mxu0 0
    %787 = vmatpush1.bf16.msra.mxu0 0
    %788 = vmatprep.subr.bf16.mxu0 0
    %789 = vmatpush1.bf16.msra.mxu0 0
    %790 = vmatprep.subr.bf16.mxu0 0
    %791 = vmatpush1.bf16.msra.mxu0 0
    %792 = vmatprep.subr.bf16.mxu0 0
    %793 = vmatpush1.bf16.msra.mxu0 %v774
    %794 = vmatprep.subr.bf16.mxu0 0
    %795 = vmatpush1.bf16.msra.mxu0 %v773
    %796 = vmatprep.subr.bf16.mxu0 0
    %797 = vmatpush2.bf16.msra.mxu0 0
    %798 = vmatprep.subr.bf16.mxu0 0
    %799 = vmatpush2.bf16.msra.mxu0 0
    %800 = vmatprep.subr.bf16.mxu0 0
    %801 = vmatpush2.bf16.msra.mxu0 0
    %802 = vmatprep.subr.bf16.mxu0 0
    %803 = vmatpush2.bf16.msra.mxu0 0
    %804 = vmatprep.subr.bf16.mxu0 0
    %805 = vmatpush2.bf16.msra.mxu0 0
    %806 = vmatprep.subr.bf16.mxu0 0
    %807 = vmatpush2.bf16.msra.mxu0 0
    %808 = vmatprep.subr.bf16.mxu0 0
    %809 = vmatpush2.bf16.msra.mxu0 0
    %810 = vmatprep.subr.bf16.mxu0 0
    %811 = vmatpush2.bf16.msra.mxu0 0
    %812 = vmatprep.mubr.bf16.mxu0 0
    %813 = vmatmul.mubr.bf16.gmra.mxu0 %v778
    %v814 = vpop.f32.mrf.mxu0
    %v815 = vadd.f32 %v760, %v814
    %v816 = vpop.f32.mrf.mxu0
    %v817 = vpop.f32.mrf.mxu0
    %v818 = vpop.f32.mrf.mxu0
    %819 = vdwg.mxu0
    %v820 = vmax.f32 %v815, 0.0
    %v822 = vrot.slane %v820, 2
    %v824 = vsub.f32 %v820, %v822
    %v825 = vmul.f32 %v824, %v824
    %vm826 = vcmask 254976
    %v827 = vsel %vm826, %v825, 0.0
    %828 = vadd.xlane.f32.xlu0 %v827
    %v829 = vpop.xlane.xlu0 %828
    %v830 = vrsqrt.pop %v829
    %v831 = vmul.f32 %v829, %v830
    %vm832 = vcmp.eq.f32.partialorder %v829, inf
    %v833 = vsel %vm832, %v829, %v831
    %vm834 = vcmp.eq.f32.partialorder %v829, 0.0
    %v835 = vand.u32 %v829, 2147483648
    %v836 = vsel %vm834, %v835, %v833
    %v838 = vlaneseq
    %v839 = vshrl.u32 %v838, 7
    %v840 = vsub.s32 %v156, %v839
    %v841 = vrot.slane %v836, %v840
    %vm843 = vcmask 8192
    %844 = vst.msk [vmem:[#allocation2] sm:$0x1] %vm843, %v841
    // Predicated region
    $region26: #{tpu_custom_call.1} parent=1 // pred_check
      _
    $region27: #{tpu_custom_call.1} parent=1 // pred_check_branch
      %846 = sbr.rel (0) target = $region29
    $region28: #{tpu_custom_call.1} parent=1 // pred_region
      %s848 = ssub.s32 16, 16
      %849 = vsyncadd [#allocation3], %s848
      %s851 = sshll.u32 [#allocation2], 4
      %s852 = int_to_ptr.vmem [resolvable:$true] %s851
      %854 = dma.vmem_to_hbm [thread:$0]  %s852, 16, %s6, [#allocation3]
    $region29: #{tpu_custom_call.1} parent=1 // pred_fallthru
      _
    // Predicated region
    $region30: #{tpu_custom_call.1} parent=1 // pred_check
      _
    $region31: #{tpu_custom_call.1} parent=1 // pred_check_branch
      %856 = sbr.rel (0) target = $region33
    $region32: #{tpu_custom_call.1} parent=1 // pred_region
      %857 = dma.done [#allocation3], 16
    $region33: #{tpu_custom_call.1} parent=1 // pred_fallthru
      _
    %858 = vsyncpa [#allocation3], 1

</llo_original>
